<compile_context>
chip_gen: v5e
topology: v5e:2x2
jax: 0.10.0
libtpu: 0.0.40
codegen_flags: <defaults>
</compile_context>

<pallas_src>
import jax
import jax.numpy as jnp
from jax.experimental import pallas as pl
from jax.experimental.pallas import tpu as pltpu

INPUT_DIM = 200
HIDDEN_DIM = 250
OUTPUT_DIM = 50

# Lane-aligned (multiple of 128) padded *output* feature dims.  The fc1
# contraction dim stays at the true 200: Mosaic masks the lane padding of an
# unaligned contraction dim for the MXU, and the reference check below gates it.
HID_PAD = 256
OUT_PAD = 128

# Cap so 2x double-buffered x (f32) + out (f32) tiles + weights fit v5e's
# 16 MiB scoped-VMEM default (v6e/v7x have 32 MiB defaults).
MAX_TILE_B = 4096


def _round_up(x, m):
    return (x + m - 1) // m * m


def _elementwise_dtype():
    """bf16 elementwise (bias/ReLU/hidden) on bf16-native VPUs (v6e/v7x), else f32."""
    try:
        kind = jax.devices()[0].device_kind.lower()
    except Exception:
        kind = ""
    if ("v6" in kind) or ("v7" in kind) or ("7x" in kind):
        return jnp.bfloat16
    return jnp.float32


def _batch_dim_semantics():
    """CORE_PARALLEL on multi-TensorCore chips (v7x); plain parallel otherwise."""
    try:
        if getattr(jax.devices()[0], "num_cores", 1) > 1:
            return (pltpu.CORE_PARALLEL,)
    except Exception:
        pass
    return ("parallel",)


def _make_kernel(ew_dtype):
    def kernel(x_ref, w1_ref, b1_ref, w2_ref, b2_ref, o_ref):
        # fc1: cast x to bf16 in-VMEM (no wrapper copy); MXU with f32 accumulate.
        x = x_ref[...].astype(jnp.bfloat16)
        h = jnp.dot(x, w1_ref[...], preferred_element_type=jnp.float32)
        # bias + ReLU in ew_dtype (bf16 on v6e/v7x, f32 on v5e).
        h = jnp.maximum(h.astype(ew_dtype) + b1_ref[...].astype(ew_dtype), 0.0)
        # fc2: bf16 operands on the MXU, f32 accumulate; bias + tanh in f32.
        y = jnp.dot(h.astype(jnp.bfloat16), w2_ref[...],
                    preferred_element_type=jnp.float32)
        o_ref[...] = jnp.tanh(y + b2_ref[...]).astype(o_ref.dtype)
    return kernel


def prepare_params(w1, b1, w2, b2):
    """Pad + cast the Linear params ONCE (hoisted out of the per-call path).

    w1: (200, 250), b1: (250,), w2: (250, 50), b2: (50,), stored (in, out)-major
    (i.e. already transposed w.r.t. PyTorch's (out, in) Linear weight layout).
    """
    w1p = jnp.zeros((INPUT_DIM, HID_PAD), jnp.bfloat16).at[:, :HIDDEN_DIM].set(
        w1.astype(jnp.bfloat16))
    b1p = jnp.zeros((1, HID_PAD), jnp.float32).at[0, :HIDDEN_DIM].set(b1)
    w2p = jnp.zeros((HID_PAD, OUT_PAD), jnp.bfloat16).at[:HIDDEN_DIM, :OUTPUT_DIM].set(
        w2.astype(jnp.bfloat16))
    b2p = jnp.zeros((1, OUT_PAD), jnp.float32).at[0, :OUTPUT_DIM].set(b2)
    return w1p, b1p, w2p, b2p


def mlp_branch(x, params, *, tile_b=1024, full_output=False):
    """Forward pass of MLPBranch.

    x: (B, 200) float32, unpadded.  params: output of prepare_params().
    Returns (B, 50) f32 by default; full_output=True returns the lane-dense
    (B, 128) kernel output whose padded columns are exactly zero (tanh(0)=0),
    so L2 / triplet distances are unchanged and the slicing pass is skipped.
    """
    w1p, b1p, w2p, b2p = params
    B = x.shape[0]

    tile_b = max(8, min(tile_b, MAX_TILE_B, _round_up(B, 8)))
    grid = (pl.cdiv(B, tile_b),)  # ragged last block handled by Pallas masking

    cost = pl.CostEstimate(
        flops=2 * B * (INPUT_DIM * HIDDEN_DIM + HIDDEN_DIM * OUTPUT_DIM),
        transcendentals=B * OUTPUT_DIM,
        bytes_accessed=(x.size * x.dtype.itemsize
                        + w1p.size * 2 + w2p.size * 2
                        + b1p.size * 4 + b2p.size * 4
                        + B * OUT_PAD * 4),
    )

    out = pl.pallas_call(
        _make_kernel(_elementwise_dtype()),
        out_shape=jax.ShapeDtypeStruct((B, OUT_PAD), jnp.float32),
        grid_spec=pltpu.PrefetchScalarGridSpec(
            num_scalar_prefetch=0,
            grid=grid,
            in_specs=[
                # x streams over the batch grid axis; last dim = full 200.
                pl.BlockSpec((tile_b, INPUT_DIM), lambda i: (i, 0)),
                # Weights / biases: same block every step -> stay resident in VMEM.
                pl.BlockSpec((INPUT_DIM, HID_PAD), lambda i: (0, 0)),
                pl.BlockSpec((1, HID_PAD), lambda i: (0, 0)),
                pl.BlockSpec((HID_PAD, OUT_PAD), lambda i: (0, 0)),
                pl.BlockSpec((1, OUT_PAD), lambda i: (0, 0)),
            ],
            out_specs=pl.BlockSpec((tile_b, OUT_PAD), lambda i: (i, 0)),
        ),
        compiler_params=pltpu.CompilerParams(
            dimension_semantics=_batch_dim_semantics()),
        cost_estimate=cost,
    )(x, w1p, b1p, w2p, b2p)

    if full_output:
        return out  # (B, 128); columns 50..127 are exactly 0.0
    return out[:, :OUTPUT_DIM]


def mlp_triplet(anchor, positive, negative, params, **kwargs):
    """Triplet forward: one pallas_call over the stacked (3B, 200) batch,
    since anchor/positive/negative branches share weights."""
    b = anchor.shape[0]
    x = jnp.concatenate([anchor, positive, negative], axis=0)
    out = mlp_branch(x, params, **kwargs)
    return out[:b], out[b:2 * b], out[2 * b:]


def init_params(key):
    # Deterministic synthetic init (PyTorch-like uniform fan-in scaling),
    # stored already transposed to (in, out) for the kernel.
    k1, k2, k3, k4 = jax.random.split(key, 4)
    bound1 = 1.0 / (INPUT_DIM ** 0.5)
    bound2 = 1.0 / (HIDDEN_DIM ** 0.5)
    w1 = jax.random.uniform(k1, (INPUT_DIM, HIDDEN_DIM), jnp.float32, -bound1, bound1)
    b1 = jax.random.uniform(k2, (HIDDEN_DIM,), jnp.float32, -bound1, bound1)
    w2 = jax.random.uniform(k3, (HIDDEN_DIM, OUTPUT_DIM), jnp.float32, -bound2, bound2)
    b2 = jax.random.uniform(k4, (OUTPUT_DIM,), jnp.float32, -bound2, bound2)
    return w1, b1, w2, b2


def _reference(x, w1, b1, w2, b2, ew_dtype):
    """Same bf16-operand / f32-accumulate recipe as the kernel (tight check)."""
    h = jnp.dot(x.astype(jnp.bfloat16), w1.astype(jnp.bfloat16),
                preferred_element_type=jnp.float32)
    h = jnp.maximum(h.astype(ew_dtype) + b1.astype(ew_dtype), 0.0)
    y = jnp.dot(h.astype(jnp.bfloat16), w2.astype(jnp.bfloat16),
                preferred_element_type=jnp.float32)
    return jnp.tanh(y + b2)


if __name__ == "__main__":
    key = jax.random.PRNGKey(0)
    kx, kp = jax.random.split(key)

    B = 8  # small batch
    x = jax.random.normal(kx, (B, INPUT_DIM), jnp.float32)
    w1, b1, w2, b2 = init_params(kp)
    params = prepare_params(w1, b1, w2, b2)  # padded/cast once, reused across calls
    ew = _elementwise_dtype()

    out = mlp_branch(x, params)
    jax.block_until_ready(out)
    assert out.shape == (B, OUTPUT_DIM)

    # Tight check vs. the same bf16-operand / f32-accumulate recipe.
    ref_bf16 = _reference(x, w1, b1, w2, b2, ew)
    assert jnp.allclose(out, ref_bf16, atol=2e-2, rtol=2e-2)

    # Loose check vs. pure-f32 PyTorch-equivalent math (bf16 MXU operands).
    ref_f32 = jnp.tanh(jnp.maximum(x @ w1 + b1, 0.0) @ w2 + b2)
    assert jnp.allclose(out, ref_f32, atol=5e-2, rtol=5e-2)

    # Lane-dense padded output path: extra columns are exactly zero.
    out_full = mlp_branch(x, params, full_output=True)
    jax.block_until_ready(out_full)
    assert out_full.shape == (B, OUT_PAD)
    assert jnp.allclose(out_full[:, OUTPUT_DIM:], 0.0, atol=1e-6)
    assert jnp.allclose(out_full[:, :OUTPUT_DIM], out, atol=1e-6)

    # Multi-step grid with a ragged last block (no batch pre-padding).
    kr, kt = jax.random.split(kx)
    B2 = 20
    x2 = jax.random.normal(kr, (B2, INPUT_DIM), jnp.float32)
    out2 = mlp_branch(x2, params, tile_b=8)
    jax.block_until_ready(out2)
    assert out2.shape == (B2, OUTPUT_DIM)
    assert jnp.allclose(out2, _reference(x2, w1, b1, w2, b2, ew), atol=2e-2, rtol=2e-2)

    # Triplet API: anchor/positive/negative fused into one call (shared weights).
    ka, kb, kc = jax.random.split(kt, 3)
    a = jax.random.normal(ka, (B, INPUT_DIM), jnp.float32)
    p = jax.random.normal(kb, (B, INPUT_DIM), jnp.float32)
    n = jax.random.normal(kc, (B, INPUT_DIM), jnp.float32)
    oa, opos, oneg = mlp_triplet(a, p, n, params)
    jax.block_until_ready((oa, opos, oneg))
    assert oa.shape == opos.shape == oneg.shape == (B, OUTPUT_DIM)
    assert jnp.allclose(oa, _reference(a, w1, b1, w2, b2, ew), atol=2e-2, rtol=2e-2)

    print("KERNEL_OK")
</pallas_src>

<mosaic_0001>
module attributes {stable_mosaic.version = 11 : i64} {
  func.func @kernel(%arg0: i32, %arg1: memref<8x200xf32, #tpu.memory_space<vmem>>, %arg2: memref<200x256xbf16, #tpu.memory_space<vmem>>, %arg3: memref<1x256xf32, #tpu.memory_space<vmem>>, %arg4: memref<256x128xbf16, #tpu.memory_space<vmem>>, %arg5: memref<1x128xf32, #tpu.memory_space<vmem>>, %arg6: memref<8x128xf32, #tpu.memory_space<vmem>>) attributes {dimension_semantics = [#tpu.dimension_semantics<parallel>], iteration_bounds = array<i64: 1>, scalar_prefetch = 0 : i64, scratch_operands = 0 : i64, tpu.core_type = #tpu.core_type<tc>, window_params = [{transform_indices = @transform_0, window_bounds = array<i64: 8, 200>}, {pipeline_mode = #tpu.pipeline_mode<synchronous>, transform_indices = @transform_1, window_bounds = array<i64: 200, 256>}, {pipeline_mode = #tpu.pipeline_mode<synchronous>, transform_indices = @transform_2, window_bounds = array<i64: 1, 256>}, {pipeline_mode = #tpu.pipeline_mode<synchronous>, transform_indices = @transform_3, window_bounds = array<i64: 256, 128>}, {pipeline_mode = #tpu.pipeline_mode<synchronous>, transform_indices = @transform_4, window_bounds = array<i64: 1, 128>}, {transform_indices = @transform_5, window_bounds = array<i64: 8, 128>}]} {
    %c0 = arith.constant 0 : index
    %c0_0 = arith.constant 0 : index
    %0 = vector.load %arg1[%c0, %c0_0] : memref<8x200xf32, #tpu.memory_space<vmem>>, vector<8x200xf32>
    %1 = arith.truncf %0 : vector<8x200xf32> to vector<8x200xbf16>
    %c0_1 = arith.constant 0 : index
    %c0_2 = arith.constant 0 : index
    %2 = vector.load %arg2[%c0_1, %c0_2] : memref<200x256xbf16, #tpu.memory_space<vmem>>, vector<200x256xbf16>
    %cst = arith.constant dense<0.000000e+00> : vector<8x256xf32>
    %3 = tpu.matmul %1, %2, %cst {dimension_numbers = #tpu.dot_dimension_numbers<[1], [0], [0], [1], [0, 0, 1, 1], [], []>} : vector<8x200xbf16>, vector<200x256xbf16>, vector<8x256xf32> -> vector<8x256xf32>
    %c0_3 = arith.constant 0 : index
    %c0_4 = arith.constant 0 : index
    %4 = vector.load %arg3[%c0_3, %c0_4] : memref<1x256xf32, #tpu.memory_space<vmem>>, vector<1x256xf32>
    %5 = vector.broadcast %4 : vector<1x256xf32> to vector<8x256xf32>
    %6 = arith.addf %3, %5 : vector<8x256xf32>
    %cst_5 = arith.constant 0.000000e+00 : f32
    %7 = vector.broadcast %cst_5 : f32 to vector<8x256xf32>
    %8 = arith.maximumf %6, %7 : vector<8x256xf32>
    %9 = arith.truncf %8 : vector<8x256xf32> to vector<8x256xbf16>
    %c0_6 = arith.constant 0 : index
    %c0_7 = arith.constant 0 : index
    %10 = vector.load %arg4[%c0_6, %c0_7] : memref<256x128xbf16, #tpu.memory_space<vmem>>, vector<256x128xbf16>
    %cst_8 = arith.constant dense<0.000000e+00> : vector<8x128xf32>
    %11 = tpu.matmul %9, %10, %cst_8 {dimension_numbers = #tpu.dot_dimension_numbers<[1], [0], [0], [1], [0, 0, 1, 1], [], []>} : vector<8x256xbf16>, vector<256x128xbf16>, vector<8x128xf32> -> vector<8x128xf32>
    %c0_9 = arith.constant 0 : index
    %c0_10 = arith.constant 0 : index
    %12 = vector.load %arg5[%c0_9, %c0_10] : memref<1x128xf32, #tpu.memory_space<vmem>>, vector<1x128xf32>
    %13 = vector.broadcast %12 : vector<1x128xf32> to vector<8x128xf32>
    %14 = arith.addf %11, %13 : vector<8x128xf32>
    %15 = math.tanh %14 : vector<8x128xf32>
    %c0_11 = arith.constant 0 : index
    %c0_12 = arith.constant 0 : index
    %16 = vector.load %arg6[%c0_11, %c0_12] : memref<8x128xf32, #tpu.memory_space<vmem>>, vector<8x128xf32>
    tpu.vector_store %arg6[%c0_11, %c0_12], %15 {strides = array<i32>} : memref<8x128xf32, #tpu.memory_space<vmem>>, vector<8x128xf32>,
    return
  }
  func.func @transform_0(%arg0: i32) -> (i32, i32) {
    %c0_i32 = arith.constant 0 : i32
    %c0_i32_0 = arith.constant 0 : i32
    return %arg0, %c0_i32 : i32, i32
  }
  func.func @transform_1(%arg0: i32) -> (i32, i32) {
    %c0_i32 = arith.constant 0 : i32
    %c0_i32_0 = arith.constant 0 : i32
    %c0_i32_1 = arith.constant 0 : i32
    return %c0_i32, %c0_i32_0 : i32, i32
  }
  func.func @transform_2(%arg0: i32) -> (i32, i32) {
    %c0_i32 = arith.constant 0 : i32
    %c0_i32_0 = arith.constant 0 : i32
    %c0_i32_1 = arith.constant 0 : i32
    return %c0_i32, %c0_i32_0 : i32, i32
  }
  func.func @transform_3(%arg0: i32) -> (i32, i32) {
    %c0_i32 = arith.constant 0 : i32
    %c0_i32_0 = arith.constant 0 : i32
    %c0_i32_1 = arith.constant 0 : i32
    return %c0_i32, %c0_i32_0 : i32, i32
  }
  func.func @transform_4(%arg0: i32) -> (i32, i32) {
    %c0_i32 = arith.constant 0 : i32
    %c0_i32_0 = arith.constant 0 : i32
    %c0_i32_1 = arith.constant 0 : i32
    return %c0_i32, %c0_i32_0 : i32, i32
  }
  func.func @transform_5(%arg0: i32) -> (i32, i32) {
    %c0_i32 = arith.constant 0 : i32
    %c0_i32_0 = arith.constant 0 : i32
    return %arg0, %c0_i32 : i32, i32
  }
}

</mosaic_0001>

<llo_original>
// kernel: tpu_custom_call.1
$region0: #{tpu_custom_call.1}
  #allocation0 [shape = 'u32[]', space=smem, size = 0x4, offset = 0x4, fixed_abs, tag = 'smem constant byte address 0x4 - core index']
  #allocation1 [shape = 'u32[72,128]{1,0:T(1,128)}', space=vmem, size = 0x9000, scoped, tag = 'internal scratch']
  %s0 = inlined_call_operand.hbm [shape: f32[8,200], index: 0, kind: input, shape index: {}]
  %s1 = inlined_call_operand.hbm [shape: bf16[200,256], index: 1, kind: input, shape index: {}]
  %s2 = inlined_call_operand.hbm [shape: f32[1,256], index: 2, kind: input, shape index: {}]
  %s3 = inlined_call_operand.hbm [shape: bf16[256,128], index: 3, kind: input, shape index: {}]
  %s4 = inlined_call_operand.vmem [shape: f32[1,128], index: 4, kind: input, shape index: {}]
  %s5 = inlined_call_operand.hbm [shape: f32[8,128], index: 5, kind: output, shape index: {}]
  %s6 = sld [smem:[#allocation0]]
  $region46: #{tpu_custom_call.1} parent=0
    _
  %s8 = ssub.s32 1, %s6
  %s9 = scalar_select 0, %s8, %s6
  $region1: #{tpu_custom_call.1} parent=0
    #allocation2 [shape = 'u8[8192]{0}', space=vmem, size = 0x2000, scoped, tag = 'input window, operand 0, single buffered']
    #allocation3 [shape = 's32[1]{0}', space=sflag, size = 0x4, scoped, tag = 'scoped memory for tpu_custom_call.1']
    #allocation4 [shape = 's32[1]{0}', space=sflag, size = 0x4, scoped, tag = 'scoped memory for tpu_custom_call.1']
    #allocation5 [shape = 'u8[102400]{0}', space=vmem, size = 0x19000, scoped, tag = 'input window, operand 1, single buffered']
    #allocation6 [shape = 's32[1]{0}', space=sflag, size = 0x4, scoped, tag = 'scoped memory for tpu_custom_call.1']
    #allocation7 [shape = 'u8[1024]{0}', space=vmem, size = 0x400, scoped, tag = 'input window, operand 2, single buffered']
    #allocation8 [shape = 'u8[65536]{0}', space=vmem, size = 0x10000, scoped, tag = 'input window, operand 3, single buffered']
    #allocation9 [shape = 's32[1]{0}', space=sflag, size = 0x4, scoped, tag = 'scoped memory for tpu_custom_call.1']
    #allocation10 [shape = 'u8[4096]{0}', space=vmem, size = 0x1000, scoped, tag = 'output window, operand 0, single buffered']
    %10 = vsyncpa [#allocation3], 0
    %11 = vsyncpa [#allocation6], 0
    %12 = vsyncpa [#allocation9], 0
    %13 = vsyncpa [#allocation4], 0
    // Predicated region
    $region2: #{tpu_custom_call.1} parent=1 // pred_check
      _
    $region3: #{tpu_custom_call.1} parent=1 // pred_check_branch
      %15 = sbr.rel (0) target = $region5
    $region4: #{tpu_custom_call.1} parent=1 // pred_region
      %17 = vsyncadd [#allocation3], 0
      %s19 = sshll.u32 %s0, 4
      %s20 = int_to_ptr.hbm [resolvable:$true] %s19
      %s21 = sshll.u32 [#allocation2], 4
      %s22 = int_to_ptr.vmem [resolvable:$true] %s21
      %24 = dma.hbm_to_vmem [thread:$0]  %s20, 256, %s22, [#allocation3]
    $region5: #{tpu_custom_call.1} parent=1 // pred_fallthru
      _
    // Predicated region
    $region6: #{tpu_custom_call.1} parent=1 // pred_check
      _
    $region7: #{tpu_custom_call.1} parent=1 // pred_check_branch
      %26 = sbr.rel (0) target = $region9
    $region8: #{tpu_custom_call.1} parent=1 // pred_region
      %28 = vsyncadd [#allocation6], 0
      %s29 = sshll.u32 %s1, 4
      %s30 = int_to_ptr.hbm [resolvable:$true] %s29
      %s31 = sshll.u32 [#allocation5], 4
      %s32 = int_to_ptr.vmem [resolvable:$true] %s31
      %37 = dma.hbm_to_vmem [thread:$0]  %s30, 3200, %s32, [#allocation6], 128, 128, 8
    $region9: #{tpu_custom_call.1} parent=1 // pred_fallthru
      _
    // Predicated region
    $region10: #{tpu_custom_call.1} parent=1 // pred_check
      _
    $region11: #{tpu_custom_call.1} parent=1 // pred_check_branch
      %39 = sbr.rel (0) target = $region13
    $region12: #{tpu_custom_call.1} parent=1 // pred_region
      %41 = vsyncadd [#allocation6], 0
      %s43 = sshll.u32 %s2, 4
      %s44 = int_to_ptr.hbm [resolvable:$true] %s43
      %s45 = sshll.u32 [#allocation7], 4
      %s46 = int_to_ptr.vmem [resolvable:$true] %s45
      %48 = dma.hbm_to_vmem [thread:$0]  %s44, 32, %s46, [#allocation6]
    $region13: #{tpu_custom_call.1} parent=1 // pred_fallthru
      _
    // Predicated region
    $region14: #{tpu_custom_call.1} parent=1 // pred_check
      _
    $region15: #{tpu_custom_call.1} parent=1 // pred_check_branch
      %50 = sbr.rel (0) target = $region17
    $region16: #{tpu_custom_call.1} parent=1 // pred_region
      %52 = vsyncadd [#allocation9], 0
      %s53 = sshll.u32 %s3, 4
      %s54 = int_to_ptr.hbm [resolvable:$true] %s53
      %s55 = sshll.u32 [#allocation8], 4
      %s56 = int_to_ptr.vmem [resolvable:$true] %s55
      %61 = dma.hbm_to_vmem [thread:$0]  %s54, 2048, %s56, [#allocation9], 64, 64, 4
    $region17: #{tpu_custom_call.1} parent=1 // pred_fallthru
      _
    // Predicated region
    $region18: #{tpu_custom_call.1} parent=1 // pred_check
      _
    $region19: #{tpu_custom_call.1} parent=1 // pred_check_branch
      %63 = sbr.rel (0) target = $region21
    $region20: #{tpu_custom_call.1} parent=1 // pred_region
      _
    $region21: #{tpu_custom_call.1} parent=1 // pred_fallthru
      _
    // Predicated region
    $region22: #{tpu_custom_call.1} parent=1 // pred_check
      _
    $region23: #{tpu_custom_call.1} parent=1 // pred_check_branch
      %65 = sbr.rel (0) target = $region25
    $region24: #{tpu_custom_call.1} parent=1 // pred_region
      %67 = dma.done [#allocation3], 256
    $region25: #{tpu_custom_call.1} parent=1 // pred_fallthru
      _
    // Predicated region
    $region26: #{tpu_custom_call.1} parent=1 // pred_check
      _
    $region27: #{tpu_custom_call.1} parent=1 // pred_check_branch
      %69 = sbr.rel (0) target = $region29
    $region28: #{tpu_custom_call.1} parent=1 // pred_region
      %71 = dma.done [#allocation6], 3200
    $region29: #{tpu_custom_call.1} parent=1 // pred_fallthru
      _
    // Predicated region
    $region30: #{tpu_custom_call.1} parent=1 // pred_check
      _
    $region31: #{tpu_custom_call.1} parent=1 // pred_check_branch
      %73 = sbr.rel (0) target = $region33
    $region32: #{tpu_custom_call.1} parent=1 // pred_region
      %75 = dma.done [#allocation6], 32
    $region33: #{tpu_custom_call.1} parent=1 // pred_fallthru
      _
    // Predicated region
    $region34: #{tpu_custom_call.1} parent=1 // pred_check
      _
    $region35: #{tpu_custom_call.1} parent=1 // pred_check_branch
      %77 = sbr.rel (0) target = $region37
    $region36: #{tpu_custom_call.1} parent=1 // pred_region
      %79 = dma.done [#allocation9], 2048
    $region37: #{tpu_custom_call.1} parent=1 // pred_fallthru
      _
    %v81 = vld [vmem:[#allocation2] sm:$0xff]
    %v82 = vld [vmem:[#allocation2 + $0x8] sm:$0xff]
    %v83 = vpack.c.bf16 %v81, %v81
    %v84 = vpack.c.bf16 %v82, %v82
    %v85 = vld [vmem:[#allocation5] sm:$0xff]
    %v86 = vld [vmem:[#allocation5 + $0x8] sm:$0xff]
    %v87 = vld [vmem:[#allocation5 + $0x10] sm:$0xff]
    %v88 = vld [vmem:[#allocation5 + $0x18] sm:$0xff]
    %v89 = vld [vmem:[#allocation5 + $0x20] sm:$0xff]
    %v90 = vld [vmem:[#allocation5 + $0x28] sm:$0xff]
    %v91 = vld [vmem:[#allocation5 + $0x30] sm:$0xff]
    %v92 = vld [vmem:[#allocation5 + $0x38] sm:$0xff]
    %v93 = vld [vmem:[#allocation5 + $0x40] sm:$0xff]
    %v94 = vld [vmem:[#allocation5 + $0x48] sm:$0xff]
    %v95 = vld [vmem:[#allocation5 + $0x50] sm:$0xff]
    %v96 = vld [vmem:[#allocation5 + $0x58] sm:$0xff]
    %v97 = vld [vmem:[#allocation5 + $0x60] sm:$0xff]
    %v98 = vld [vmem:[#allocation5 + $0x68] sm:$0xff]
    %v99 = vld [vmem:[#allocation5 + $0x70] sm:$0xff]
    %v100 = vld [vmem:[#allocation5 + $0x78] sm:$0xff]
    %v101 = vld [vmem:[#allocation5 + $0x80] sm:$0xff]
    %v102 = vld [vmem:[#allocation5 + $0x88] sm:$0xff]
    %v103 = vld [vmem:[#allocation5 + $0x90] sm:$0xff]
    %v104 = vld [vmem:[#allocation5 + $0x98] sm:$0xff]
    %v105 = vld [vmem:[#allocation5 + $0xa0] sm:$0xff]
    %v106 = vld [vmem:[#allocation5 + $0xa8] sm:$0xff]
    %v107 = vld [vmem:[#allocation5 + $0xb0] sm:$0xff]
    %v108 = vld [vmem:[#allocation5 + $0xb8] sm:$0xff]
    %v109 = vld [vmem:[#allocation5 + $0xc0] sm:$0xff]
    %v110 = vld [vmem:[#allocation7] sm:$0x3]
    %v112 = vperm.slane %v110, 0
    %v113 = vperm.slane %v110, 1
    %v141 = vunpack.c.l.b16 %v85
    %v142 = vunpack.c.h.b16 %v85
    %v143 = vunpack.c.l.b16 %v86
    %v144 = vunpack.c.h.b16 %v86
    %v145 = vunpack.c.l.b16 %v87
    %v146 = vunpack.c.h.b16 %v87
    %v147 = vunpack.c.l.b16 %v88
    %v148 = vunpack.c.h.b16 %v88
    %v149 = vunpack.c.l.b16 %v89
    %v150 = vunpack.c.h.b16 %v89
    %v151 = vunpack.c.l.b16 %v90
    %v152 = vunpack.c.h.b16 %v90
    %v153 = vunpack.c.l.b16 %v91
    %v154 = vunpack.c.h.b16 %v91
    %v155 = vunpack.c.l.b16 %v92
    %v156 = vunpack.c.h.b16 %v92
    %v157 = vunpack.c.l.b16 %v93
    %v158 = vunpack.c.h.b16 %v93
    %v159 = vunpack.c.l.b16 %v94
    %v160 = vunpack.c.h.b16 %v94
    %v161 = vunpack.c.l.b16 %v95
    %v162 = vunpack.c.h.b16 %v95
    %v163 = vunpack.c.l.b16 %v96
    %v164 = vunpack.c.h.b16 %v96
    %v165 = vunpack.c.l.b16 %v97
    %v166 = vunpack.c.h.b16 %v97
    %v167 = vunpack.c.l.b16 %v98
    %v168 = vunpack.c.h.b16 %v98
    %v169 = vunpack.c.l.b16 %v99
    %v170 = vunpack.c.h.b16 %v99
    %v171 = vunpack.c.l.b16 %v100
    %v172 = vunpack.c.h.b16 %v100
    %v173 = vunpack.c.l.b16 %v101
    %v174 = vunpack.c.h.b16 %v101
    %v175 = vunpack.c.l.b16 %v102
    %v176 = vunpack.c.h.b16 %v102
    %v177 = vunpack.c.l.b16 %v103
    %v178 = vunpack.c.h.b16 %v103
    %v179 = vunpack.c.l.b16 %v104
    %v180 = vunpack.c.h.b16 %v104
    %v181 = vunpack.c.l.b16 %v105
    %v182 = vunpack.c.h.b16 %v105
    %v183 = vunpack.c.l.b16 %v106
    %v184 = vunpack.c.h.b16 %v106
    %v185 = vunpack.c.l.b16 %v107
    %v186 = vunpack.c.h.b16 %v107
    %v187 = vunpack.c.l.b16 %v108
    %v188 = vunpack.c.h.b16 %v108
    %v189 = vunpack.c.l.b16 %v109
    %v190 = vunpack.c.h.b16 %v109
    %v191 = vpack.c.b16 %v143, %v141
    %v192 = vpack.c.b16 %v144, %v142
    %v193 = vpack.c.b16 %v147, %v145
    %v194 = vpack.c.b16 %v148, %v146
    %v195 = vpack.c.b16 %v151, %v149
    %v196 = vpack.c.b16 %v152, %v150
    %v197 = vpack.c.b16 %v155, %v153
    %v198 = vpack.c.b16 %v156, %v154
    %v199 = vpack.c.b16 %v159, %v157
    %v200 = vpack.c.b16 %v160, %v158
    %v201 = vpack.c.b16 %v163, %v161
    %v202 = vpack.c.b16 %v164, %v162
    %v203 = vpack.c.b16 %v167, %v165
    %v204 = vpack.c.b16 %v168, %v166
    %v205 = vpack.c.b16 %v171, %v169
    %v206 = vpack.c.b16 %v172, %v170
    %v207 = vpack.c.b16 %v175, %v173
    %v208 = vpack.c.b16 %v176, %v174
    %v209 = vpack.c.b16 %v179, %v177
    %v210 = vpack.c.b16 %v180, %v178
    %v211 = vpack.c.b16 %v183, %v181
    %v212 = vpack.c.b16 %v184, %v182
    %v213 = vpack.c.b16 %v187, %v185
    %v214 = vpack.c.b16 %v188, %v186
    %v215 = vpack.c.b16 %v189, %v189
    %v216 = vpack.c.b16 %v190, %v190
    %vm241 = vcmask 588800
    %v243 = vsel %vm241, %v84, 0
    %vm245 = vcmask 1043456
    %v247 = vsel %vm245, %v215, 0
    %v250 = vsel %vm245, %v216, 0
    %252 = vmatpush.bf16.msra.mxu0 %v205
    %253 = vmatpush.bf16.msra.mxu0 %v203
    %254 = vmatpush.bf16.msra.mxu0 %v201
    %255 = vmatpush.bf16.msra.mxu0 %v199
    %256 = vmatpush.bf16.msra.mxu0 %v197
    %257 = vmatpush.bf16.msra.mxu0 %v195
    %258 = vmatpush.bf16.msra.mxu0 %v193
    %259 = vmatpush.bf16.msra.mxu0 %v191
    %260 = vmatmul.bf16.gmra.mxu0 %v83
    %v261 = vpop.f32.mrf.mxu0
    %v262 = vadd.f32 %v112, %v261
    %v263 = vpop.f32.mrf.mxu0
    %264 = vdwg.mxu0
    %265 = vmatpush.bf16.msra.mxu0 0
    %266 = vmatpush.bf16.msra.mxu0 0
    %267 = vmatpush.bf16.msra.mxu0 0
    %268 = vmatpush.bf16.msra.mxu0 %v247
    %269 = vmatpush.bf16.msra.mxu0 %v213
    %270 = vmatpush.bf16.msra.mxu0 %v211
    %271 = vmatpush.bf16.msra.mxu0 %v209
    %272 = vmatpush.bf16.msra.mxu0 %v207
    %273 = vmatmul.bf16.gmra.mxu0 %v243
    %v274 = vpop.f32.mrf.mxu0
    %v275 = vadd.f32 %v262, %v274
    %v276 = vpop.f32.mrf.mxu0
    %277 = vdwg.mxu0
    %278 = vmatpush.bf16.msra.mxu0 %v206
    %279 = vmatpush.bf16.msra.mxu0 %v204
    %280 = vmatpush.bf16.msra.mxu0 %v202
    %281 = vmatpush.bf16.msra.mxu0 %v200
    %282 = vmatpush.bf16.msra.mxu0 %v198
    %283 = vmatpush.bf16.msra.mxu0 %v196
    %284 = vmatpush.bf16.msra.mxu0 %v194
    %285 = vmatpush.bf16.msra.mxu0 %v192
    %286 = vmatmul.bf16.gmra.mxu0 %v83
    %v287 = vpop.f32.mrf.mxu0
    %v288 = vadd.f32 %v113, %v287
    %v289 = vpop.f32.mrf.mxu0
    %290 = vdwg.mxu0
    %291 = vmatpush.bf16.msra.mxu0 0
    %292 = vmatpush.bf16.msra.mxu0 0
    %293 = vmatpush.bf16.msra.mxu0 0
    %294 = vmatpush.bf16.msra.mxu0 %v250
    %295 = vmatpush.bf16.msra.mxu0 %v214
    %296 = vmatpush.bf16.msra.mxu0 %v212
    %297 = vmatpush.bf16.msra.mxu0 %v210
    %298 = vmatpush.bf16.msra.mxu0 %v208
    %299 = vmatmul.bf16.gmra.mxu0 %v243
    %v300 = vpop.f32.mrf.mxu0
    %v301 = vadd.f32 %v288, %v300
    %v302 = vpop.f32.mrf.mxu0
    %303 = vdwg.mxu0
    %v304 = vmax.f32 %v275, 0.0
    %v305 = vmax.f32 %v301, 0.0
    %v306 = vpack.c.bf16 %v304, %v304
    %v307 = vpack.c.bf16 %v305, %v305
    %v308 = vld [vmem:[#allocation8] sm:$0xf]
    %v309 = vld [vmem:[#allocation8 + $0x4] sm:$0xf]
    %v310 = vld [vmem:[#allocation8 + $0x8] sm:$0xf]
    %v311 = vld [vmem:[#allocation8 + $0xc] sm:$0xf]
    %v312 = vld [vmem:[#allocation8 + $0x10] sm:$0xf]
    %v313 = vld [vmem:[#allocation8 + $0x14] sm:$0xf]
    %v314 = vld [vmem:[#allocation8 + $0x18] sm:$0xf]
    %v315 = vld [vmem:[#allocation8 + $0x1c] sm:$0xf]
    %v316 = vld [vmem:[#allocation8 + $0x20] sm:$0xf]
    %v317 = vld [vmem:[#allocation8 + $0x24] sm:$0xf]
    %v318 = vld [vmem:[#allocation8 + $0x28] sm:$0xf]
    %v319 = vld [vmem:[#allocation8 + $0x2c] sm:$0xf]
    %v320 = vld [vmem:[#allocation8 + $0x30] sm:$0xf]
    %v321 = vld [vmem:[#allocation8 + $0x34] sm:$0xf]
    %v322 = vld [vmem:[#allocation8 + $0x38] sm:$0xf]
    %v323 = vld [vmem:[#allocation8 + $0x3c] sm:$0xf]
    %v324 = vld [vmem:[#allocation8 + $0x40] sm:$0xf]
    %v325 = vld [vmem:[#allocation8 + $0x44] sm:$0xf]
    %v326 = vld [vmem:[#allocation8 + $0x48] sm:$0xf]
    %v327 = vld [vmem:[#allocation8 + $0x4c] sm:$0xf]
    %v328 = vld [vmem:[#allocation8 + $0x50] sm:$0xf]
    %v329 = vld [vmem:[#allocation8 + $0x54] sm:$0xf]
    %v330 = vld [vmem:[#allocation8 + $0x58] sm:$0xf]
    %v331 = vld [vmem:[#allocation8 + $0x5c] sm:$0xf]
    %v332 = vld [vmem:[#allocation8 + $0x60] sm:$0xf]
    %v333 = vld [vmem:[#allocation8 + $0x64] sm:$0xf]
    %v334 = vld [vmem:[#allocation8 + $0x68] sm:$0xf]
    %v335 = vld [vmem:[#allocation8 + $0x6c] sm:$0xf]
    %v336 = vld [vmem:[#allocation8 + $0x70] sm:$0xf]
    %v337 = vld [vmem:[#allocation8 + $0x74] sm:$0xf]
    %v338 = vld [vmem:[#allocation8 + $0x78] sm:$0xf]
    %v339 = vld [vmem:[#allocation8 + $0x7c] sm:$0xf]
    %v340 = vld [vmem:[%s4] sm:$0x1]
    %v342 = vperm.slane %v340, 0
    %v376 = vunpack.c.l.b16 %v308
    %v377 = vunpack.c.l.b16 %v309
    %v378 = vunpack.c.l.b16 %v310
    %v379 = vunpack.c.l.b16 %v311
    %v380 = vunpack.c.l.b16 %v312
    %v381 = vunpack.c.l.b16 %v313
    %v382 = vunpack.c.l.b16 %v314
    %v383 = vunpack.c.l.b16 %v315
    %v384 = vunpack.c.l.b16 %v316
    %v385 = vunpack.c.l.b16 %v317
    %v386 = vunpack.c.l.b16 %v318
    %v387 = vunpack.c.l.b16 %v319
    %v388 = vunpack.c.l.b16 %v320
    %v389 = vunpack.c.l.b16 %v321
    %v390 = vunpack.c.l.b16 %v322
    %v391 = vunpack.c.l.b16 %v323
    %v392 = vunpack.c.l.b16 %v324
    %v393 = vunpack.c.l.b16 %v325
    %v394 = vunpack.c.l.b16 %v326
    %v395 = vunpack.c.l.b16 %v327
    %v396 = vunpack.c.l.b16 %v328
    %v397 = vunpack.c.l.b16 %v329
    %v398 = vunpack.c.l.b16 %v330
    %v399 = vunpack.c.l.b16 %v331
    %v400 = vunpack.c.l.b16 %v332
    %v401 = vunpack.c.l.b16 %v333
    %v402 = vunpack.c.l.b16 %v334
    %v403 = vunpack.c.l.b16 %v335
    %v404 = vunpack.c.l.b16 %v336
    %v405 = vunpack.c.l.b16 %v337
    %v406 = vunpack.c.l.b16 %v338
    %v407 = vunpack.c.l.b16 %v339
    %v408 = vpack.c.b16 %v377, %v376
    %v409 = vpack.c.b16 %v379, %v378
    %v410 = vpack.c.b16 %v381, %v380
    %v411 = vpack.c.b16 %v383, %v382
    %v412 = vpack.c.b16 %v385, %v384
    %v413 = vpack.c.b16 %v387, %v386
    %v414 = vpack.c.b16 %v389, %v388
    %v415 = vpack.c.b16 %v391, %v390
    %v416 = vpack.c.b16 %v393, %v392
    %v417 = vpack.c.b16 %v395, %v394
    %v418 = vpack.c.b16 %v397, %v396
    %v419 = vpack.c.b16 %v399, %v398
    %v420 = vpack.c.b16 %v401, %v400
    %v421 = vpack.c.b16 %v403, %v402
    %v422 = vpack.c.b16 %v405, %v404
    %v423 = vpack.c.b16 %v407, %v406
    %440 = vmatpush.bf16.msra.mxu0 %v415
    %441 = vmatpush.bf16.msra.mxu0 %v414
    %442 = vmatpush.bf16.msra.mxu0 %v413
    %443 = vmatpush.bf16.msra.mxu0 %v412
    %444 = vmatpush.bf16.msra.mxu0 %v411
    %445 = vmatpush.bf16.msra.mxu0 %v410
    %446 = vmatpush.bf16.msra.mxu0 %v409
    %447 = vmatpush.bf16.msra.mxu0 %v408
    %448 = vmatmul.bf16.gmra.mxu0 %v306
    %v449 = vpop.f32.mrf.mxu0
    %v450 = vadd.f32 %v342, %v449
    %v451 = vpop.f32.mrf.mxu0
    %452 = vdwg.mxu0
    %453 = vmatpush.bf16.msra.mxu0 %v423
    %454 = vmatpush.bf16.msra.mxu0 %v422
    %455 = vmatpush.bf16.msra.mxu0 %v421
    %456 = vmatpush.bf16.msra.mxu0 %v420
    %457 = vmatpush.bf16.msra.mxu0 %v419
    %458 = vmatpush.bf16.msra.mxu0 %v418
    %459 = vmatpush.bf16.msra.mxu0 %v417
    %460 = vmatpush.bf16.msra.mxu0 %v416
    %461 = vmatmul.bf16.gmra.mxu0 %v307
    %v462 = vpop.f32.mrf.mxu0
    %v463 = vadd.f32 %v450, %v462
    %v464 = vpop.f32.mrf.mxu0
    %465 = vdwg.mxu0
    %v466 = vtanh.pop %v463
    %467 = vst [vmem:[#allocation10] sm:$0xff] %v466
    // Predicated region
    $region38: #{tpu_custom_call.1} parent=1 // pred_check
      _
    $region39: #{tpu_custom_call.1} parent=1 // pred_check_branch
      %469 = sbr.rel (0) target = $region41
    $region40: #{tpu_custom_call.1} parent=1 // pred_region
      %471 = vsyncadd [#allocation4], 0
      %s473 = sshll.u32 [#allocation10], 4
      %s474 = int_to_ptr.vmem [resolvable:$true] %s473
      %s475 = sshll.u32 %s5, 4
      %s476 = int_to_ptr.hbm [resolvable:$true] %s475
      %478 = dma.vmem_to_hbm [thread:$0]  %s474, 128, %s476, [#allocation4]
    $region41: #{tpu_custom_call.1} parent=1 // pred_fallthru
      _
    // Predicated region
    $region42: #{tpu_custom_call.1} parent=1 // pred_check
      _
    $region43: #{tpu_custom_call.1} parent=1 // pred_check_branch
      %480 = sbr.rel (0) target = $region45
    $region44: #{tpu_custom_call.1} parent=1 // pred_region
      %482 = dma.done [#allocation4], 128
    $region45: #{tpu_custom_call.1} parent=1 // pred_fallthru
      _
    %483 = vsyncpa [#allocation3], 1
    %484 = vsyncpa [#allocation6], 1
    %485 = vsyncpa [#allocation9], 1
    %486 = vsyncpa [#allocation4], 1

</llo_original>
